<compile_context>
chip_gen: v6e
topology: v6e:2x2x1
jax: 0.10.0
libtpu: 0.0.40
codegen_flags: <defaults>
</compile_context>

<pallas_src>
import functools

import jax
import jax.numpy as jnp
from jax.experimental import pallas as pl
from jax.experimental.pallas import tpu as pltpu


def _round_up(x, m):
    return ((x + m - 1) // m) * m


def _inverse_model_kernel(s_ref, ns_ref,
                          w1s_ref, w1n_ref, b1_ref,
                          w2_ref, b2_ref,
                          w3_ref, b3_ref,
                          out_ref):
    cd = w1s_ref.dtype  # compute dtype of the prepared weights (bf16 or f32)

    # Layer 1: split matmul replaces concat([s, ns], axis=1) @ w1 (no lane concat).
    h1 = jnp.dot(s_ref[...].astype(cd), w1s_ref[...],
                 preferred_element_type=jnp.float32)
    h1 = h1 + jnp.dot(ns_ref[...].astype(cd), w1n_ref[...],
                      preferred_element_type=jnp.float32)
    h1 = jnp.maximum(h1 + b1_ref[...], 0.0)          # f32 bias + ReLU, lane-dense (TM, H_pad)

    # Layer 2.
    h2 = jnp.dot(h1.astype(cd), w2_ref[...], preferred_element_type=jnp.float32)
    h2 = jnp.maximum(h2 + b2_ref[...], 0.0)

    # Layer 3 (logits), lane-padded output slab -> unmasked vst.
    logits = jnp.dot(h2.astype(cd), w3_ref[...], preferred_element_type=jnp.float32)
    out_ref[...] = (logits + b3_ref[...]).astype(out_ref.dtype)


def prepare_params(params, state_dim, *, compute_dtype=jnp.bfloat16):
    """One-time weight preparation (call once, reuse the result every forward).

    Splits w1 along its input axis (avoids in-kernel concat), casts matmul
    operands to `compute_dtype`, zero-pads the hidden dim and the action dim
    up to lane-dense multiples of 128 (numerically exact).

    Returns (prepared_pytree, n_actions).
    """
    w1, b1, w2, b2, w3, b3 = params
    H = w1.shape[1]
    n_actions = w3.shape[1]
    H_pad = _round_up(H, 128)
    N_pad = _round_up(n_actions, 128)
    cd = compute_dtype

    prepared = dict(
        w1_s=jnp.pad(w1[:state_dim], ((0, 0), (0, H_pad - H))).astype(cd),
        w1_ns=jnp.pad(w1[state_dim:], ((0, 0), (0, H_pad - H))).astype(cd),
        b1=jnp.pad(b1, ((0, 0), (0, H_pad - H))),                       # f32 (1, H_pad)
        w2=jnp.pad(w2, ((0, H_pad - H), (0, H_pad - H))).astype(cd),    # (H_pad, H_pad)
        b2=jnp.pad(b2, ((0, 0), (0, H_pad - H))),
        w3=jnp.pad(w3, ((0, H_pad - H), (0, N_pad - n_actions))).astype(cd),
        b3=jnp.pad(b3, ((0, 0), (0, N_pad - n_actions))),
    )
    return prepared, n_actions


def _pick_tm(b_rows, tm_cap):
    """Batch tile: multiple of 8; >=2 grid steps when B allows (v7x megacore)."""
    if b_rows <= 8:
        return 8
    return max(8, min(tm_cap, _round_up(pl.cdiv(b_rows, 2), 8)))


@functools.partial(jax.jit, static_argnames=("n_actions", "tm", "out_dtype"))
def inverse_model_forward(states, next_states, prepared, n_actions,
                          *, tm=512, out_dtype=jnp.float32):
    """states, next_states: (B, state_dim) float32. Returns (B, n_actions)."""
    B, state_dim = states.shape
    N_pad = prepared["w3"].shape[1]

    # Sub-8 batches: pad rows to one full 8-sublane tile (tiny, rare).
    B_run = B
    if B < 8:
        states = jnp.pad(states, ((0, 8 - B), (0, 0)))
        next_states = jnp.pad(next_states, ((0, 8 - B), (0, 0)))
        B_run = 8

    TM = _pick_tm(B_run, tm)
    grid = (pl.cdiv(B_run, TM),)          # ragged last tile handled by Pallas
    rows_out = _round_up(B_run, 8)        # 8-sublane-aligned output slab

    # Batch-tiled activations / output; weights and biases are whole-array
    # blocks with constant index_map -> fetched once, VMEM-resident across steps.
    act_spec = lambda feat: pl.BlockSpec((TM, feat), lambda i: (i, 0))
    resident = lambda arr: pl.BlockSpec(arr.shape, lambda i: (0, 0))

    out_padded = pl.pallas_call(
        _inverse_model_kernel,
        out_shape=jax.ShapeDtypeStruct((rows_out, N_pad), out_dtype),
        grid=grid,
        in_specs=[
            act_spec(state_dim),                     # states tile   (f32, cast in-kernel)
            act_spec(state_dim),                     # next_states tile
            resident(prepared["w1_s"]), resident(prepared["w1_ns"]), resident(prepared["b1"]),
            resident(prepared["w2"]), resident(prepared["b2"]),
            resident(prepared["w3"]), resident(prepared["b3"]),
        ],
        out_specs=act_spec(N_pad),
        compiler_params=pltpu.CompilerParams(
            dimension_semantics=("parallel",),
            vmem_limit_bytes=32 * 1024 * 1024),
    )(states, next_states,
      prepared["w1_s"], prepared["w1_ns"], prepared["b1"],
      prepared["w2"], prepared["b2"],
      prepared["w3"], prepared["b3"])

    return out_padded[:B, :n_actions]


def init_params(key, state_dim, hidden_size, n_actions):
    """PyTorch-style init U(-1/sqrt(fan_in), 1/sqrt(fan_in)).
    Weights stored as [in, out] (transposed vs. nn.Linear); biases (1, out)."""
    dims = [(2 * state_dim, hidden_size),
            (hidden_size, hidden_size),
            (hidden_size, n_actions)]
    params = []
    for (fan_in, fan_out) in dims:
        key, kw, kb = jax.random.split(key, 3)
        bound = 1.0 / jnp.sqrt(fan_in)
        w = jax.random.uniform(kw, (fan_in, fan_out), jnp.float32, -bound, bound)
        b = jax.random.uniform(kb, (1, fan_out), jnp.float32, -bound, bound)
        params += [w, b]
    return tuple(params)


def reference_forward(states, next_states, params):
    # Pure-JAX f32 reference for correctness check.
    w1, b1, w2, b2, w3, b3 = params
    x = jnp.concatenate([states, next_states], axis=1)
    h1 = jnp.maximum(x @ w1 + b1, 0.0)
    h2 = jnp.maximum(h1 @ w2 + b2, 0.0)
    return h2 @ w3 + b3


if __name__ == "__main__":
    # Small shapes consistent with the module: state_dim=16, hidden=64,
    # n_actions=4, batch=2.
    B, STATE_DIM, HIDDEN, N_ACTIONS = 2, 16, 64, 4

    key = jax.random.PRNGKey(0)
    key, ks, kns = jax.random.split(key, 3)
    states = jax.random.normal(ks, (B, STATE_DIM), jnp.float32)
    next_states = jax.random.normal(kns, (B, STATE_DIM), jnp.float32)
    params = init_params(key, STATE_DIM, HIDDEN, N_ACTIONS)

    # One-time weight prep (out of the hot path), then the fused kernel.
    prepared, n_actions = prepare_params(params, STATE_DIM)
    out = inverse_model_forward(states, next_states, prepared, n_actions=n_actions)
    out = jax.block_until_ready(out)

    ref = reference_forward(states, next_states, params)
    assert out.shape == (B, N_ACTIONS)
    # bf16 matmul operands (f32 accumulation) -> bf16-appropriate tolerance.
    assert jnp.allclose(out, ref, atol=5e-2, rtol=5e-2), "mismatch vs reference"

    print("KERNEL_OK")
</pallas_src>

<mosaic_0001>
module attributes {stable_mosaic.version = 11 : i64} {
  func.func @_inverse_model_kernel(%arg0: i32, %arg1: memref<8x16xf32, #tpu.memory_space<vmem>>, %arg2: memref<8x16xf32, #tpu.memory_space<vmem>>, %arg3: memref<16x128xbf16, #tpu.memory_space<vmem>>, %arg4: memref<16x128xbf16, #tpu.memory_space<vmem>>, %arg5: memref<1x128xf32, #tpu.memory_space<vmem>>, %arg6: memref<128x128xbf16, #tpu.memory_space<vmem>>, %arg7: memref<1x128xf32, #tpu.memory_space<vmem>>, %arg8: memref<128x128xbf16, #tpu.memory_space<vmem>>, %arg9: memref<1x128xf32, #tpu.memory_space<vmem>>, %arg10: memref<8x128xf32, #tpu.memory_space<vmem>>) attributes {dimension_semantics = [#tpu.dimension_semantics<parallel>], iteration_bounds = array<i64: 1>, scalar_prefetch = 0 : i64, scratch_operands = 0 : i64, tpu.core_type = #tpu.core_type<tc>, window_params = [{transform_indices = @transform_0, window_bounds = array<i64: 8, 16>}, {transform_indices = @transform_1, window_bounds = array<i64: 8, 16>}, {pipeline_mode = #tpu.pipeline_mode<synchronous>, transform_indices = @transform_2, window_bounds = array<i64: 16, 128>}, {pipeline_mode = #tpu.pipeline_mode<synchronous>, transform_indices = @transform_3, window_bounds = array<i64: 16, 128>}, {pipeline_mode = #tpu.pipeline_mode<synchronous>, transform_indices = @transform_4, window_bounds = array<i64: 1, 128>}, {pipeline_mode = #tpu.pipeline_mode<synchronous>, transform_indices = @transform_5, window_bounds = array<i64: 128, 128>}, {pipeline_mode = #tpu.pipeline_mode<synchronous>, transform_indices = @transform_6, window_bounds = array<i64: 1, 128>}, {pipeline_mode = #tpu.pipeline_mode<synchronous>, transform_indices = @transform_7, window_bounds = array<i64: 128, 128>}, {pipeline_mode = #tpu.pipeline_mode<synchronous>, transform_indices = @transform_8, window_bounds = array<i64: 1, 128>}, {transform_indices = @transform_9, window_bounds = array<i64: 8, 128>}]} {
    %c0 = arith.constant 0 : index
    %c0_0 = arith.constant 0 : index
    %0 = vector.load %arg1[%c0, %c0_0] : memref<8x16xf32, #tpu.memory_space<vmem>>, vector<8x16xf32>
    %1 = arith.truncf %0 : vector<8x16xf32> to vector<8x16xbf16>
    %c0_1 = arith.constant 0 : index
    %c0_2 = arith.constant 0 : index
    %2 = vector.load %arg3[%c0_1, %c0_2] : memref<16x128xbf16, #tpu.memory_space<vmem>>, vector<16x128xbf16>
    %cst = arith.constant dense<0.000000e+00> : vector<8x128xf32>
    %3 = tpu.matmul %1, %2, %cst {dimension_numbers = #tpu.dot_dimension_numbers<[1], [0], [0], [1], [0, 0, 1, 1], [], []>} : vector<8x16xbf16>, vector<16x128xbf16>, vector<8x128xf32> -> vector<8x128xf32>
    %c0_3 = arith.constant 0 : index
    %c0_4 = arith.constant 0 : index
    %4 = vector.load %arg2[%c0_3, %c0_4] : memref<8x16xf32, #tpu.memory_space<vmem>>, vector<8x16xf32>
    %5 = arith.truncf %4 : vector<8x16xf32> to vector<8x16xbf16>
    %c0_5 = arith.constant 0 : index
    %c0_6 = arith.constant 0 : index
    %6 = vector.load %arg4[%c0_5, %c0_6] : memref<16x128xbf16, #tpu.memory_space<vmem>>, vector<16x128xbf16>
    %cst_7 = arith.constant dense<0.000000e+00> : vector<8x128xf32>
    %7 = tpu.matmul %5, %6, %cst_7 {dimension_numbers = #tpu.dot_dimension_numbers<[1], [0], [0], [1], [0, 0, 1, 1], [], []>} : vector<8x16xbf16>, vector<16x128xbf16>, vector<8x128xf32> -> vector<8x128xf32>
    %8 = arith.addf %3, %7 : vector<8x128xf32>
    %c0_8 = arith.constant 0 : index
    %c0_9 = arith.constant 0 : index
    %9 = vector.load %arg5[%c0_8, %c0_9] : memref<1x128xf32, #tpu.memory_space<vmem>>, vector<1x128xf32>
    %10 = vector.broadcast %9 : vector<1x128xf32> to vector<8x128xf32>
    %11 = arith.addf %8, %10 : vector<8x128xf32>
    %cst_10 = arith.constant 0.000000e+00 : f32
    %12 = vector.broadcast %cst_10 : f32 to vector<8x128xf32>
    %13 = arith.maximumf %11, %12 : vector<8x128xf32>
    %14 = arith.truncf %13 : vector<8x128xf32> to vector<8x128xbf16>
    %c0_11 = arith.constant 0 : index
    %c0_12 = arith.constant 0 : index
    %15 = vector.load %arg6[%c0_11, %c0_12] : memref<128x128xbf16, #tpu.memory_space<vmem>>, vector<128x128xbf16>
    %cst_13 = arith.constant dense<0.000000e+00> : vector<8x128xf32>
    %16 = tpu.matmul %14, %15, %cst_13 {dimension_numbers = #tpu.dot_dimension_numbers<[1], [0], [0], [1], [0, 0, 1, 1], [], []>} : vector<8x128xbf16>, vector<128x128xbf16>, vector<8x128xf32> -> vector<8x128xf32>
    %c0_14 = arith.constant 0 : index
    %c0_15 = arith.constant 0 : index
    %17 = vector.load %arg7[%c0_14, %c0_15] : memref<1x128xf32, #tpu.memory_space<vmem>>, vector<1x128xf32>
    %18 = vector.broadcast %17 : vector<1x128xf32> to vector<8x128xf32>
    %19 = arith.addf %16, %18 : vector<8x128xf32>
    %cst_16 = arith.constant 0.000000e+00 : f32
    %20 = vector.broadcast %cst_16 : f32 to vector<8x128xf32>
    %21 = arith.maximumf %19, %20 : vector<8x128xf32>
    %22 = arith.truncf %21 : vector<8x128xf32> to vector<8x128xbf16>
    %c0_17 = arith.constant 0 : index
    %c0_18 = arith.constant 0 : index
    %23 = vector.load %arg8[%c0_17, %c0_18] : memref<128x128xbf16, #tpu.memory_space<vmem>>, vector<128x128xbf16>
    %cst_19 = arith.constant dense<0.000000e+00> : vector<8x128xf32>
    %24 = tpu.matmul %22, %23, %cst_19 {dimension_numbers = #tpu.dot_dimension_numbers<[1], [0], [0], [1], [0, 0, 1, 1], [], []>} : vector<8x128xbf16>, vector<128x128xbf16>, vector<8x128xf32> -> vector<8x128xf32>
    %c0_20 = arith.constant 0 : index
    %c0_21 = arith.constant 0 : index
    %25 = vector.load %arg9[%c0_20, %c0_21] : memref<1x128xf32, #tpu.memory_space<vmem>>, vector<1x128xf32>
    %26 = vector.broadcast %25 : vector<1x128xf32> to vector<8x128xf32>
    %27 = arith.addf %24, %26 : vector<8x128xf32>
    %c0_22 = arith.constant 0 : index
    %c0_23 = arith.constant 0 : index
    %28 = vector.load %arg10[%c0_22, %c0_23] : memref<8x128xf32, #tpu.memory_space<vmem>>, vector<8x128xf32>
    tpu.vector_store %arg10[%c0_22, %c0_23], %27 {strides = array<i32>} : memref<8x128xf32, #tpu.memory_space<vmem>>, vector<8x128xf32>,
    return
  }
  func.func @transform_0(%arg0: i32) -> (i32, i32) {
    %c0_i32 = arith.constant 0 : i32
    %c0_i32_0 = arith.constant 0 : i32
    return %arg0, %c0_i32 : i32, i32
  }
  func.func @transform_1(%arg0: i32) -> (i32, i32) {
    %c0_i32 = arith.constant 0 : i32
    %c0_i32_0 = arith.constant 0 : i32
    return %arg0, %c0_i32 : i32, i32
  }
  func.func @transform_2(%arg0: i32) -> (i32, i32) {
    %c0_i32 = arith.constant 0 : i32
    %c0_i32_0 = arith.constant 0 : i32
    %c0_i32_1 = arith.constant 0 : i32
    return %c0_i32, %c0_i32_0 : i32, i32
  }
  func.func @transform_3(%arg0: i32) -> (i32, i32) {
    %c0_i32 = arith.constant 0 : i32
    %c0_i32_0 = arith.constant 0 : i32
    %c0_i32_1 = arith.constant 0 : i32
    return %c0_i32, %c0_i32_0 : i32, i32
  }
  func.func @transform_4(%arg0: i32) -> (i32, i32) {
    %c0_i32 = arith.constant 0 : i32
    %c0_i32_0 = arith.constant 0 : i32
    %c0_i32_1 = arith.constant 0 : i32
    return %c0_i32, %c0_i32_0 : i32, i32
  }
  func.func @transform_5(%arg0: i32) -> (i32, i32) {
    %c0_i32 = arith.constant 0 : i32
    %c0_i32_0 = arith.constant 0 : i32
    %c0_i32_1 = arith.constant 0 : i32
    return %c0_i32, %c0_i32_0 : i32, i32
  }
  func.func @transform_6(%arg0: i32) -> (i32, i32) {
    %c0_i32 = arith.constant 0 : i32
    %c0_i32_0 = arith.constant 0 : i32
    %c0_i32_1 = arith.constant 0 : i32
    return %c0_i32, %c0_i32_0 : i32, i32
  }
  func.func @transform_7(%arg0: i32) -> (i32, i32) {
    %c0_i32 = arith.constant 0 : i32
    %c0_i32_0 = arith.constant 0 : i32
    %c0_i32_1 = arith.constant 0 : i32
    return %c0_i32, %c0_i32_0 : i32, i32
  }
  func.func @transform_8(%arg0: i32) -> (i32, i32) {
    %c0_i32 = arith.constant 0 : i32
    %c0_i32_0 = arith.constant 0 : i32
    %c0_i32_1 = arith.constant 0 : i32
    return %c0_i32, %c0_i32_0 : i32, i32
  }
  func.func @transform_9(%arg0: i32) -> (i32, i32) {
    %c0_i32 = arith.constant 0 : i32
    %c0_i32_0 = arith.constant 0 : i32
    return %arg0, %c0_i32 : i32, i32
  }
}

</mosaic_0001>

<llo_original>
// kernel: inverse_model_forward.1
$region0: #{inverse_model_forward.1}
  #allocation0 [shape = 'u32[]', space=smem, size = 0x4, offset = 0x4, fixed_abs, tag = 'smem constant byte address 0x4 - core index']
  #allocation1 [shape = 'u32[144,128]{1,0:T(1,128)}', space=vmem, size = 0x12000, scoped, tag = 'internal scratch']
  %s0 = inlined_call_operand.vmem [shape: f32[8,16], index: 0, kind: input, shape index: {}]
  %s1 = inlined_call_operand.vmem [shape: f32[8,16], index: 1, kind: input, shape index: {}]
  %s2 = inlined_call_operand.vmem [shape: bf16[16,128], index: 2, kind: input, shape index: {}]
  %s3 = inlined_call_operand.vmem [shape: bf16[16,128], index: 3, kind: input, shape index: {}]
  %s4 = inlined_call_operand.vmem [shape: f32[1,128], index: 4, kind: input, shape index: {}]
  %s5 = inlined_call_operand.hbm [shape: bf16[128,128], index: 5, kind: input, shape index: {}]
  %s6 = inlined_call_operand.vmem [shape: f32[1,128], index: 6, kind: input, shape index: {}]
  %s7 = inlined_call_operand.hbm [shape: bf16[128,128], index: 7, kind: input, shape index: {}]
  %s8 = inlined_call_operand.vmem [shape: f32[1,128], index: 8, kind: input, shape index: {}]
  %s9 = inlined_call_operand.vmem [shape: f32[8,128], index: 9, kind: output, shape index: {}]
  %s10 = sld [smem:[#allocation0]]
  $region54: #{inverse_model_forward.1} parent=0
    _
  %s12 = ssub.s32 1, %s10
  %s13 = scalar_select 0, %s12, %s10
  $region1: #{inverse_model_forward.1} parent=0
    #allocation2 [shape = 'u8[32768]{0}', space=vmem, size = 0x8000, scoped, tag = 'input window, operand 5, single buffered']
    #allocation3 [shape = 's32[1]{0}', space=sflag, size = 0x4, scoped, tag = 'scoped memory for inverse_model_forward.1']
    #allocation4 [shape = 'u8[32768]{0}', space=vmem, size = 0x8000, scoped, tag = 'input window, operand 7, single buffered']
    #allocation5 [shape = 's32[1]{0}', space=sflag, size = 0x4, scoped, tag = 'scoped memory for inverse_model_forward.1']
    %14 = vsyncpa [#allocation3], 0
    %15 = vsyncpa [#allocation5], 0
    // Predicated region
    $region2: #{inverse_model_forward.1} parent=1 // pred_check
      _
    $region3: #{inverse_model_forward.1} parent=1 // pred_check_branch
      %17 = sbr.rel (0) target = $region5
    $region4: #{inverse_model_forward.1} parent=1 // pred_region
      _
    $region5: #{inverse_model_forward.1} parent=1 // pred_fallthru
      _
    // Predicated region
    $region6: #{inverse_model_forward.1} parent=1 // pred_check
      _
    $region7: #{inverse_model_forward.1} parent=1 // pred_check_branch
      %19 = sbr.rel (0) target = $region9
    $region8: #{inverse_model_forward.1} parent=1 // pred_region
      _
    $region9: #{inverse_model_forward.1} parent=1 // pred_fallthru
      _
    // Predicated region
    $region10: #{inverse_model_forward.1} parent=1 // pred_check
      _
    $region11: #{inverse_model_forward.1} parent=1 // pred_check_branch
      %21 = sbr.rel (0) target = $region13
    $region12: #{inverse_model_forward.1} parent=1 // pred_region
      _
    $region13: #{inverse_model_forward.1} parent=1 // pred_fallthru
      _
    // Predicated region
    $region14: #{inverse_model_forward.1} parent=1 // pred_check
      _
    $region15: #{inverse_model_forward.1} parent=1 // pred_check_branch
      %23 = sbr.rel (0) target = $region17
    $region16: #{inverse_model_forward.1} parent=1 // pred_region
      _
    $region17: #{inverse_model_forward.1} parent=1 // pred_fallthru
      _
    // Predicated region
    $region18: #{inverse_model_forward.1} parent=1 // pred_check
      _
    $region19: #{inverse_model_forward.1} parent=1 // pred_check_branch
      %25 = sbr.rel (0) target = $region21
    $region20: #{inverse_model_forward.1} parent=1 // pred_region
      _
    $region21: #{inverse_model_forward.1} parent=1 // pred_fallthru
      _
    // Predicated region
    $region22: #{inverse_model_forward.1} parent=1 // pred_check
      _
    $region23: #{inverse_model_forward.1} parent=1 // pred_check_branch
      %27 = sbr.rel (0) target = $region25
    $region24: #{inverse_model_forward.1} parent=1 // pred_region
      %s29 = ssub.s32 1024, 1024
      %30 = vsyncadd [#allocation3], %s29
      %s31 = sshll.u32 [#allocation2], 4
      %s32 = int_to_ptr.vmem [resolvable:$true] %s31
      %37 = dma.hbm_to_vmem [thread:$0]  %s5, 1024, %s32, [#allocation3], 64, 64, 4
    $region25: #{inverse_model_forward.1} parent=1 // pred_fallthru
      _
    // Predicated region
    $region26: #{inverse_model_forward.1} parent=1 // pred_check
      _
    $region27: #{inverse_model_forward.1} parent=1 // pred_check_branch
      %39 = sbr.rel (0) target = $region29
    $region28: #{inverse_model_forward.1} parent=1 // pred_region
      _
    $region29: #{inverse_model_forward.1} parent=1 // pred_fallthru
      _
    // Predicated region
    $region30: #{inverse_model_forward.1} parent=1 // pred_check
      _
    $region31: #{inverse_model_forward.1} parent=1 // pred_check_branch
      %41 = sbr.rel (0) target = $region33
    $region32: #{inverse_model_forward.1} parent=1 // pred_region
      %s43 = ssub.s32 1024, 1024
      %44 = vsyncadd [#allocation5], %s43
      %s45 = sshll.u32 [#allocation4], 4
      %s46 = int_to_ptr.vmem [resolvable:$true] %s45
      %51 = dma.hbm_to_vmem [thread:$0]  %s7, 1024, %s46, [#allocation5], 64, 64, 4
    $region33: #{inverse_model_forward.1} parent=1 // pred_fallthru
      _
    // Predicated region
    $region34: #{inverse_model_forward.1} parent=1 // pred_check
      _
    $region35: #{inverse_model_forward.1} parent=1 // pred_check_branch
      %53 = sbr.rel (0) target = $region37
    $region36: #{inverse_model_forward.1} parent=1 // pred_region
      _
    $region37: #{inverse_model_forward.1} parent=1 // pred_fallthru
      _
    // Predicated region
    $region38: #{inverse_model_forward.1} parent=1 // pred_check
      _
    $region39: #{inverse_model_forward.1} parent=1 // pred_check_branch
      %55 = sbr.rel (0) target = $region41
    $region40: #{inverse_model_forward.1} parent=1 // pred_region
      %56 = dma.done [#allocation3], 1024
    $region41: #{inverse_model_forward.1} parent=1 // pred_fallthru
      _
    // Predicated region
    $region42: #{inverse_model_forward.1} parent=1 // pred_check
      _
    $region43: #{inverse_model_forward.1} parent=1 // pred_check_branch
      %58 = sbr.rel (0) target = $region45
    $region44: #{inverse_model_forward.1} parent=1 // pred_region
      %59 = dma.done [#allocation5], 1024
    $region45: #{inverse_model_forward.1} parent=1 // pred_fallthru
      _
    %v61 = vld [vmem:[%s0] sm:$0xff]
    %v62 = vpack.c.bf16 %v61, %v61
    %v63 = vld [vmem:[%s2] sm:$0xf]
    %v64 = vld [vmem:[%s2 + $0x4] sm:$0xf]
    %v65 = vld [vmem:[%s1] sm:$0xff]
    %v66 = vpack.c.bf16 %v65, %v65
    %v67 = vld [vmem:[%s3] sm:$0xf]
    %v68 = vld [vmem:[%s3 + $0x4] sm:$0xf]
    %v71 = vunpack.c.l.b16 %v67
    %v72 = vunpack.c.l.b16 %v68
    %v73 = vpack.c.b16 %v72, %v71
    %vm75 = vcmask 130048
    %v77 = vsel %vm75, %v66, 0
    %79 = vmatprep.subr.bf16.mxu0 0
    %80 = vmatpush1.bf16.msra.mxu0 0
    %81 = vmatprep.subr.bf16.mxu0 0
    %82 = vmatpush1.bf16.msra.mxu0 0
    %83 = vmatprep.subr.bf16.mxu0 0
    %84 = vmatpush1.bf16.msra.mxu0 0
    %85 = vmatprep.subr.bf16.mxu0 0
    %86 = vmatpush1.bf16.msra.mxu0 0
    %87 = vmatprep.subr.bf16.mxu0 0
    %88 = vmatpush1.bf16.msra.mxu0 0
    %89 = vmatprep.subr.bf16.mxu0 0
    %90 = vmatpush1.bf16.msra.mxu0 0
    %91 = vmatprep.subr.bf16.mxu0 0
    %92 = vmatpush1.bf16.msra.mxu0 0
    %93 = vmatprep.subr.bf16.mxu0 0
    %94 = vmatpush1.bf16.msra.mxu0 %v73
    %95 = vmatprep.subr.bf16.mxu0 0
    %96 = vmatpush2.bf16.msra.mxu0 0
    %97 = vmatprep.subr.bf16.mxu0 0
    %98 = vmatpush2.bf16.msra.mxu0 0
    %99 = vmatprep.subr.bf16.mxu0 0
    %100 = vmatpush2.bf16.msra.mxu0 0
    %101 = vmatprep.subr.bf16.mxu0 0
    %102 = vmatpush2.bf16.msra.mxu0 0
    %103 = vmatprep.subr.bf16.mxu0 0
    %104 = vmatpush2.bf16.msra.mxu0 0
    %105 = vmatprep.subr.bf16.mxu0 0
    %106 = vmatpush2.bf16.msra.mxu0 0
    %107 = vmatprep.subr.bf16.mxu0 0
    %108 = vmatpush2.bf16.msra.mxu0 0
    %109 = vmatprep.subr.bf16.mxu0 0
    %110 = vmatpush2.bf16.msra.mxu0 0
    %111 = vmatprep.mubr.bf16.mxu0 0
    %112 = vmatmul.mubr.bf16.gmra.mxu0 %v77
    %v113 = vpop.f32.mrf.mxu0
    %v114 = vadd.f32 0.0, %v113
    %v115 = vpop.f32.mrf.mxu0
    %v116 = vpop.f32.mrf.mxu0
    %v117 = vpop.f32.mrf.mxu0
    %118 = vdwg.mxu0
    %v121 = vunpack.c.l.b16 %v63
    %v122 = vunpack.c.l.b16 %v64
    %v123 = vpack.c.b16 %v122, %v121
    %v126 = vsel %vm75, %v62, 0
    %128 = vmatprep.subr.bf16.mxu0 0
    %129 = vmatpush1.bf16.msra.mxu0 0
    %130 = vmatprep.subr.bf16.mxu0 0
    %131 = vmatpush1.bf16.msra.mxu0 0
    %132 = vmatprep.subr.bf16.mxu0 0
    %133 = vmatpush1.bf16.msra.mxu0 0
    %134 = vmatprep.subr.bf16.mxu0 0
    %135 = vmatpush1.bf16.msra.mxu0 0
    %136 = vmatprep.subr.bf16.mxu0 0
    %137 = vmatpush1.bf16.msra.mxu0 0
    %138 = vmatprep.subr.bf16.mxu0 0
    %139 = vmatpush1.bf16.msra.mxu0 0
    %140 = vmatprep.subr.bf16.mxu0 0
    %141 = vmatpush1.bf16.msra.mxu0 0
    %142 = vmatprep.subr.bf16.mxu0 0
    %143 = vmatpush1.bf16.msra.mxu0 %v123
    %144 = vmatprep.subr.bf16.mxu0 0
    %145 = vmatpush2.bf16.msra.mxu0 0
    %146 = vmatprep.subr.bf16.mxu0 0
    %147 = vmatpush2.bf16.msra.mxu0 0
    %148 = vmatprep.subr.bf16.mxu0 0
    %149 = vmatpush2.bf16.msra.mxu0 0
    %150 = vmatprep.subr.bf16.mxu0 0
    %151 = vmatpush2.bf16.msra.mxu0 0
    %152 = vmatprep.subr.bf16.mxu0 0
    %153 = vmatpush2.bf16.msra.mxu0 0
    %154 = vmatprep.subr.bf16.mxu0 0
    %155 = vmatpush2.bf16.msra.mxu0 0
    %156 = vmatprep.subr.bf16.mxu0 0
    %157 = vmatpush2.bf16.msra.mxu0 0
    %158 = vmatprep.subr.bf16.mxu0 0
    %159 = vmatpush2.bf16.msra.mxu0 0
    %160 = vmatprep.mubr.bf16.mxu0 0
    %161 = vmatmul.mubr.bf16.gmra.mxu0 %v126
    %v162 = vpop.f32.mrf.mxu0
    %v163 = vadd.f32 %v114, %v162
    %v164 = vpop.f32.mrf.mxu0
    %v165 = vpop.f32.mrf.mxu0
    %v166 = vpop.f32.mrf.mxu0
    %167 = vdwg.mxu0
    %v168 = vld [vmem:[%s4] sm:$0x1]
    %v170 = vlaneseq
    %v171 = vshrl.u32 %v170, 7
    %v172 = vsub.s32 0, %v171
    %v173 = vrot.slane %v168, %v172
    %v175 = vadd.f32 %v163, %v173
    %v176 = vmax.f32 %v175, 0.0
    %v177 = vpack.c.bf16 %v176, %v176
    %v178 = vld [vmem:[#allocation2] sm:$0xf]
    %v179 = vld [vmem:[#allocation2 + $0x4] sm:$0xf]
    %v180 = vld [vmem:[#allocation2 + $0x8] sm:$0xf]
    %v181 = vld [vmem:[#allocation2 + $0xc] sm:$0xf]
    %v182 = vld [vmem:[#allocation2 + $0x10] sm:$0xf]
    %v183 = vld [vmem:[#allocation2 + $0x14] sm:$0xf]
    %v184 = vld [vmem:[#allocation2 + $0x18] sm:$0xf]
    %v185 = vld [vmem:[#allocation2 + $0x1c] sm:$0xf]
    %v186 = vld [vmem:[#allocation2 + $0x20] sm:$0xf]
    %v187 = vld [vmem:[#allocation2 + $0x24] sm:$0xf]
    %v188 = vld [vmem:[#allocation2 + $0x28] sm:$0xf]
    %v189 = vld [vmem:[#allocation2 + $0x2c] sm:$0xf]
    %v190 = vld [vmem:[#allocation2 + $0x30] sm:$0xf]
    %v191 = vld [vmem:[#allocation2 + $0x34] sm:$0xf]
    %v192 = vld [vmem:[#allocation2 + $0x38] sm:$0xf]
    %v193 = vld [vmem:[#allocation2 + $0x3c] sm:$0xf]
    %v194 = vld [vmem:[%s6] sm:$0x1]
    %v196 = vlaneseq
    %v197 = vshrl.u32 %v196, 7
    %v198 = vsub.s32 0, %v197
    %v199 = vrot.slane %v194, %v198
    %v217 = vunpack.c.l.b16 %v178
    %v218 = vunpack.c.l.b16 %v179
    %v219 = vunpack.c.l.b16 %v180
    %v220 = vunpack.c.l.b16 %v181
    %v221 = vunpack.c.l.b16 %v182
    %v222 = vunpack.c.l.b16 %v183
    %v223 = vunpack.c.l.b16 %v184
    %v224 = vunpack.c.l.b16 %v185
    %v225 = vunpack.c.l.b16 %v186
    %v226 = vunpack.c.l.b16 %v187
    %v227 = vunpack.c.l.b16 %v188
    %v228 = vunpack.c.l.b16 %v189
    %v229 = vunpack.c.l.b16 %v190
    %v230 = vunpack.c.l.b16 %v191
    %v231 = vunpack.c.l.b16 %v192
    %v232 = vunpack.c.l.b16 %v193
    %v233 = vpack.c.b16 %v218, %v217
    %v234 = vpack.c.b16 %v220, %v219
    %v235 = vpack.c.b16 %v222, %v221
    %v236 = vpack.c.b16 %v224, %v223
    %v237 = vpack.c.b16 %v226, %v225
    %v238 = vpack.c.b16 %v228, %v227
    %v239 = vpack.c.b16 %v230, %v229
    %v240 = vpack.c.b16 %v232, %v231
    %249 = vmatprep.subr.bf16.mxu0 0
    %250 = vmatpush1.bf16.msra.mxu0 %v240
    %251 = vmatprep.subr.bf16.mxu0 0
    %252 = vmatpush1.bf16.msra.mxu0 %v239
    %253 = vmatprep.subr.bf16.mxu0 0
    %254 = vmatpush1.bf16.msra.mxu0 %v238
    %255 = vmatprep.subr.bf16.mxu0 0
    %256 = vmatpush1.bf16.msra.mxu0 %v237
    %257 = vmatprep.subr.bf16.mxu0 0
    %258 = vmatpush1.bf16.msra.mxu0 %v236
    %259 = vmatprep.subr.bf16.mxu0 0
    %260 = vmatpush1.bf16.msra.mxu0 %v235
    %261 = vmatprep.subr.bf16.mxu0 0
    %262 = vmatpush1.bf16.msra.mxu0 %v234
    %263 = vmatprep.subr.bf16.mxu0 0
    %264 = vmatpush1.bf16.msra.mxu0 %v233
    %265 = vmatprep.subr.bf16.mxu0 0
    %266 = vmatpush2.bf16.msra.mxu0 0
    %267 = vmatprep.subr.bf16.mxu0 0
    %268 = vmatpush2.bf16.msra.mxu0 0
    %269 = vmatprep.subr.bf16.mxu0 0
    %270 = vmatpush2.bf16.msra.mxu0 0
    %271 = vmatprep.subr.bf16.mxu0 0
    %272 = vmatpush2.bf16.msra.mxu0 0
    %273 = vmatprep.subr.bf16.mxu0 0
    %274 = vmatpush2.bf16.msra.mxu0 0
    %275 = vmatprep.subr.bf16.mxu0 0
    %276 = vmatpush2.bf16.msra.mxu0 0
    %277 = vmatprep.subr.bf16.mxu0 0
    %278 = vmatpush2.bf16.msra.mxu0 0
    %279 = vmatprep.subr.bf16.mxu0 0
    %280 = vmatpush2.bf16.msra.mxu0 0
    %281 = vmatprep.mubr.bf16.mxu0 0
    %282 = vmatmul.mubr.bf16.gmra.mxu0 %v177
    %v283 = vpop.f32.mrf.mxu0
    %v284 = vadd.f32 %v199, %v283
    %v285 = vpop.f32.mrf.mxu0
    %v286 = vpop.f32.mrf.mxu0
    %v287 = vpop.f32.mrf.mxu0
    %288 = vdwg.mxu0
    %v289 = vmax.f32 %v284, 0.0
    %v290 = vpack.c.bf16 %v289, %v289
    %v291 = vld [vmem:[#allocation4] sm:$0xf]
    %v292 = vld [vmem:[#allocation4 + $0x4] sm:$0xf]
    %v293 = vld [vmem:[#allocation4 + $0x8] sm:$0xf]
    %v294 = vld [vmem:[#allocation4 + $0xc] sm:$0xf]
    %v295 = vld [vmem:[#allocation4 + $0x10] sm:$0xf]
    %v296 = vld [vmem:[#allocation4 + $0x14] sm:$0xf]
    %v297 = vld [vmem:[#allocation4 + $0x18] sm:$0xf]
    %v298 = vld [vmem:[#allocation4 + $0x1c] sm:$0xf]
    %v299 = vld [vmem:[#allocation4 + $0x20] sm:$0xf]
    %v300 = vld [vmem:[#allocation4 + $0x24] sm:$0xf]
    %v301 = vld [vmem:[#allocation4 + $0x28] sm:$0xf]
    %v302 = vld [vmem:[#allocation4 + $0x2c] sm:$0xf]
    %v303 = vld [vmem:[#allocation4 + $0x30] sm:$0xf]
    %v304 = vld [vmem:[#allocation4 + $0x34] sm:$0xf]
    %v305 = vld [vmem:[#allocation4 + $0x38] sm:$0xf]
    %v306 = vld [vmem:[#allocation4 + $0x3c] sm:$0xf]
    %v307 = vld [vmem:[%s8] sm:$0x1]
    %v309 = vlaneseq
    %v310 = vshrl.u32 %v309, 7
    %v311 = vsub.s32 0, %v310
    %v312 = vrot.slane %v307, %v311
    %v330 = vunpack.c.l.b16 %v291
    %v331 = vunpack.c.l.b16 %v292
    %v332 = vunpack.c.l.b16 %v293
    %v333 = vunpack.c.l.b16 %v294
    %v334 = vunpack.c.l.b16 %v295
    %v335 = vunpack.c.l.b16 %v296
    %v336 = vunpack.c.l.b16 %v297
    %v337 = vunpack.c.l.b16 %v298
    %v338 = vunpack.c.l.b16 %v299
    %v339 = vunpack.c.l.b16 %v300
    %v340 = vunpack.c.l.b16 %v301
    %v341 = vunpack.c.l.b16 %v302
    %v342 = vunpack.c.l.b16 %v303
    %v343 = vunpack.c.l.b16 %v304
    %v344 = vunpack.c.l.b16 %v305
    %v345 = vunpack.c.l.b16 %v306
    %v346 = vpack.c.b16 %v331, %v330
    %v347 = vpack.c.b16 %v333, %v332
    %v348 = vpack.c.b16 %v335, %v334
    %v349 = vpack.c.b16 %v337, %v336
    %v350 = vpack.c.b16 %v339, %v338
    %v351 = vpack.c.b16 %v341, %v340
    %v352 = vpack.c.b16 %v343, %v342
    %v353 = vpack.c.b16 %v345, %v344
    %362 = vmatprep.subr.bf16.mxu0 0
    %363 = vmatpush1.bf16.msra.mxu0 %v353
    %364 = vmatprep.subr.bf16.mxu0 0
    %365 = vmatpush1.bf16.msra.mxu0 %v352
    %366 = vmatprep.subr.bf16.mxu0 0
    %367 = vmatpush1.bf16.msra.mxu0 %v351
    %368 = vmatprep.subr.bf16.mxu0 0
    %369 = vmatpush1.bf16.msra.mxu0 %v350
    %370 = vmatprep.subr.bf16.mxu0 0
    %371 = vmatpush1.bf16.msra.mxu0 %v349
    %372 = vmatprep.subr.bf16.mxu0 0
    %373 = vmatpush1.bf16.msra.mxu0 %v348
    %374 = vmatprep.subr.bf16.mxu0 0
    %375 = vmatpush1.bf16.msra.mxu0 %v347
    %376 = vmatprep.subr.bf16.mxu0 0
    %377 = vmatpush1.bf16.msra.mxu0 %v346
    %378 = vmatprep.subr.bf16.mxu0 0
    %379 = vmatpush2.bf16.msra.mxu0 0
    %380 = vmatprep.subr.bf16.mxu0 0
    %381 = vmatpush2.bf16.msra.mxu0 0
    %382 = vmatprep.subr.bf16.mxu0 0
    %383 = vmatpush2.bf16.msra.mxu0 0
    %384 = vmatprep.subr.bf16.mxu0 0
    %385 = vmatpush2.bf16.msra.mxu0 0
    %386 = vmatprep.subr.bf16.mxu0 0
    %387 = vmatpush2.bf16.msra.mxu0 0
    %388 = vmatprep.subr.bf16.mxu0 0
    %389 = vmatpush2.bf16.msra.mxu0 0
    %390 = vmatprep.subr.bf16.mxu0 0
    %391 = vmatpush2.bf16.msra.mxu0 0
    %392 = vmatprep.subr.bf16.mxu0 0
    %393 = vmatpush2.bf16.msra.mxu0 0
    %394 = vmatprep.mubr.bf16.mxu0 0
    %395 = vmatmul.mubr.bf16.gmra.mxu0 %v290
    %v396 = vpop.f32.mrf.mxu0
    %v397 = vadd.f32 %v312, %v396
    %v398 = vpop.f32.mrf.mxu0
    %v399 = vpop.f32.mrf.mxu0
    %v400 = vpop.f32.mrf.mxu0
    %401 = vdwg.mxu0
    %402 = vst [vmem:[%s9] sm:$0xff] %v397
    // Predicated region
    $region46: #{inverse_model_forward.1} parent=1 // pred_check
      _
    $region47: #{inverse_model_forward.1} parent=1 // pred_check_branch
      %404 = sbr.rel (0) target = $region49
    $region48: #{inverse_model_forward.1} parent=1 // pred_region
      _
    $region49: #{inverse_model_forward.1} parent=1 // pred_fallthru
      _
    // Predicated region
    $region50: #{inverse_model_forward.1} parent=1 // pred_check
      _
    $region51: #{inverse_model_forward.1} parent=1 // pred_check_branch
      %406 = sbr.rel (0) target = $region53
    $region52: #{inverse_model_forward.1} parent=1 // pred_region
      _
    $region53: #{inverse_model_forward.1} parent=1 // pred_fallthru
      _
    %407 = vsyncpa [#allocation3], 1
    %408 = vsyncpa [#allocation5], 1

</llo_original>
